<compile_context>
chip_gen: v7x
topology: tpu7x:2x2x1
jax: 0.10.0
libtpu: 0.0.40
codegen_flags: <defaults>
</compile_context>

<pallas_src>
import functools

import jax
import jax.numpy as jnp
from jax.experimental import pallas as pl
from jax.experimental.pallas import tpu as pltpu


def _penalty_kernel(x_ref, o_ref, acc_ref, *, scale, valid_b, tile_b,
                    blocks_per_core, needs_mask):
    """Accumulate sum-of-squares of the current (F, tile_b) block into VMEM."""
    c = pl.program_id(0)          # core-shard axis ("parallel")
    j = pl.program_id(1)          # batch-block axis ("arbitrary", reduction)

    @pl.when(j == 0)
    def _init():
        acc_ref[...] = jnp.zeros_like(acc_ref)

    x = x_ref[...].astype(jnp.float32)
    x2 = x * x
    if needs_mask:
        # Mask out lanes beyond the real batch size in the partial last block.
        g = c * blocks_per_core + j   # logical (global) block index
        col = jax.lax.broadcasted_iota(jnp.int32, x_ref.shape, 1) + g * tile_b
        x2 = jnp.where(col < valid_b, x2, 0.0)

    # Pure VPU elementwise accumulate; no cross-lane reduce per step.
    acc_ref[...] += x2

    @pl.when(j == pl.num_programs(1) - 1)
    def _finalize():
        row = jnp.sum(acc_ref[...], axis=1, keepdims=True)   # (F, 1) lane reduce
        tot = jnp.sum(row, axis=0, keepdims=True)             # (1, 1) sublane reduce
        # Lane-dense (1, 128) output block per core; all lanes hold the partial.
        o_ref[...] = jnp.broadcast_to(tot * scale, o_ref.shape)


def output_penalty(
    per_feature_output,
    reg_param,
    *,
    block_bytes=2 * 1024 * 1024,
    max_lanes_per_block=None,
    force_kernel=False,
    allow_megacore=True,
):
    """reg_param * mean over features of mean(output**2).

    `per_feature_output` may be a list of [B] arrays (stacked here for API
    parity with the PyTorch module) or, preferably, a pre-stacked (F, B)
    array so the kernel reads the data where it already lives.
    """
    if isinstance(per_feature_output, (list, tuple)):
        x = jnp.stack(per_feature_output, axis=0)  # (F, B)
    else:
        x = jnp.asarray(per_feature_output)
    if x.ndim == 1:
        x = x[None, :]
    F, B = x.shape
    scale = float(reg_param) / float(F * B)

    # Largest lane width (multiple of 128) keeping one block <= block_bytes.
    lanes_budget = (block_bytes // (F * 4)) // 128 * 128

    # Tiny problems (or degenerate huge-F shapes) -> plain JAX: XLA fuses this
    # reduction fine and the kernel launch overhead would dominate.
    if (not force_kernel and F * B < (1 << 18)) or lanes_budget < 128:
        xf = x.astype(jnp.float32)
        return jnp.float32(reg_param) * jnp.mean(jnp.square(xf))

    tile_b = min(int(pl.cdiv(B, 128)) * 128, int(lanes_budget))
    if max_lanes_per_block is not None:
        tile_b = min(tile_b, max(128, (max_lanes_per_block // 128) * 128))
    tile_b = int(tile_b)

    num_blocks = int(pl.cdiv(B, tile_b))
    # Shard batch blocks across 2 TensorCores only when they split evenly
    # (keeps index maps trivial and avoids dummy blocks).
    num_cores = 2 if (allow_megacore and num_blocks >= 2 and num_blocks % 2 == 0) else 1
    blocks_per_core = num_blocks // num_cores
    needs_mask = (B % tile_b) != 0

    kernel = functools.partial(
        _penalty_kernel,
        scale=scale,
        valid_b=B,
        tile_b=tile_b,
        blocks_per_core=blocks_per_core,
        needs_mask=needs_mask,
    )

    out = pl.pallas_call(
        kernel,
        out_shape=jax.ShapeDtypeStruct((1, num_cores * 128), jnp.float32),
        grid_spec=pltpu.PrefetchScalarGridSpec(
            num_scalar_prefetch=0,
            grid=(num_cores, blocks_per_core),
            in_specs=[
                pl.BlockSpec((F, tile_b),
                             lambda c, j: (0, c * blocks_per_core + j)),
            ],
            out_specs=pl.BlockSpec((1, 128), lambda c, j: (0, c)),
            scratch_shapes=[pltpu.VMEM((F, tile_b), jnp.float32)],
        ),
        compiler_params=pltpu.CompilerParams(
            dimension_semantics=("parallel", "arbitrary"),
        ),
    )(x)

    # One partial per core (replicated across its 128 lanes); sum them.
    partials = out.reshape(num_cores, 128)[:, 0]
    return jnp.sum(partials)


def _torch_style_reference(x, reg_param):
    """Mirror of the PyTorch list-comprehension semantics."""
    F = x.shape[0]
    per_feature = [jnp.mean(jnp.square(x[f].astype(jnp.float32))) for f in range(F)]
    return reg_param * (sum(per_feature) / F)


if __name__ == "__main__":
    key = jax.random.PRNGKey(0)
    reg_param = 0.01
    k1, k2, k3 = jax.random.split(key, 3)

    # Case 1: small, single block (16 features, batch 256).
    F1, B1 = 16, 256
    x1 = jax.random.normal(k1, (F1, B1), dtype=jnp.float32)
    pen1 = jax.block_until_ready(output_penalty(x1, reg_param, force_kernel=True))
    ref1 = _torch_style_reference(x1, reg_param)
    assert jnp.allclose(pen1, ref1, rtol=1e-5, atol=1e-7), (pen1, ref1)

    # Case 2: batch not a multiple of the block width, odd block count ->
    # single-core multi-block accumulation + partial-block lane mask.
    F2, B2 = 8, 320
    x2 = jax.random.normal(k2, (F2, B2), dtype=jnp.float32)
    pen2 = jax.block_until_ready(
        output_penalty(x2, reg_param, max_lanes_per_block=128, force_kernel=True))
    ref2 = _torch_style_reference(x2, reg_param)
    assert jnp.allclose(pen2, ref2, rtol=1e-5, atol=1e-7), (pen2, ref2)

    # Case 3: even block count -> exercises the 2-way "parallel" core shard
    # (runs sequentially on 1-TC chips) together with the partial-block mask.
    F3, B3 = 8, 480   # cdiv(480, 128) = 4 blocks, last one partial
    x3 = jax.random.normal(k3, (F3, B3), dtype=jnp.float32)
    pen3 = jax.block_until_ready(
        output_penalty(x3, reg_param, max_lanes_per_block=128, force_kernel=True))
    ref3 = _torch_style_reference(x3, reg_param)
    assert jnp.allclose(pen3, ref3, rtol=1e-5, atol=1e-7), (pen3, ref3)

    # Fast path (plain JAX for tiny inputs) agrees with the kernel path.
    pen1_fast = jax.block_until_ready(output_penalty(x1, reg_param))
    assert jnp.allclose(pen1_fast, pen1, rtol=1e-5, atol=1e-7), (pen1_fast, pen1)

    # List-of-arrays API (matches the PyTorch module's input convention).
    pen_list = jax.block_until_ready(
        output_penalty([x1[f] for f in range(F1)], reg_param, force_kernel=True))
    assert jnp.allclose(pen_list, pen1, rtol=1e-5, atol=1e-7), (pen_list, pen1)

    print("KERNEL_OK")
</pallas_src>

<mosaic_0001>
module attributes {stable_mosaic.version = 11 : i64} {
  func.func @_penalty_kernel(%arg0: i32, %arg1: i32, %arg2: memref<16x256xf32, #tpu.memory_space<vmem>>, %arg3: memref<1x128xf32, #tpu.memory_space<vmem>>, %arg4: memref<16x256xf32, #tpu.memory_space<vmem>>) attributes {dimension_semantics = [#tpu.dimension_semantics<parallel>, #tpu.dimension_semantics<arbitrary>], iteration_bounds = array<i64: 1, 1>, scalar_prefetch = 0 : i64, scratch_operands = 1 : i64, tpu.core_type = #tpu.core_type<tc>, window_params = [{transform_indices = @transform_0, window_bounds = array<i64: 16, 256>}, {transform_indices = @transform_1, window_bounds = array<i64: 1, 128>}]} {
    %c0_i32 = arith.constant 0 : i32
    %0 = arith.cmpi eq, %arg1, %c0_i32 : i32
    %1 = arith.extui %0 : i1 to i32
    %c0_i32_0 = arith.constant 0 : i32
    %2 = arith.cmpi ne, %1, %c0_i32_0 : i32
    scf.if %2 {
      %cst = arith.constant 0.000000e+00 : f32
      %11 = vector.broadcast %cst : f32 to vector<16x256xf32>
      %c0_8 = arith.constant 0 : index
      %c0_9 = arith.constant 0 : index
      %12 = vector.load %arg4[%c0_8, %c0_9] : memref<16x256xf32, #tpu.memory_space<vmem>>, vector<16x256xf32>
      tpu.vector_store %arg4[%c0_8, %c0_9], %11 {strides = array<i32>} : memref<16x256xf32, #tpu.memory_space<vmem>>, vector<16x256xf32>,
    } else {
    }
    %c0 = arith.constant 0 : index
    %c0_1 = arith.constant 0 : index
    %3 = vector.load %arg2[%c0, %c0_1] : memref<16x256xf32, #tpu.memory_space<vmem>>, vector<16x256xf32>
    %4 = arith.mulf %3, %3 : vector<16x256xf32>
    %c0_2 = arith.constant 0 : index
    %c0_3 = arith.constant 0 : index
    %5 = vector.load %arg4[%c0_2, %c0_3] : memref<16x256xf32, #tpu.memory_space<vmem>>, vector<16x256xf32>
    %6 = arith.addf %5, %4 : vector<16x256xf32>
    %c0_4 = arith.constant 0 : index
    %c0_5 = arith.constant 0 : index
    %7 = vector.load %arg4[%c0_4, %c0_5] : memref<16x256xf32, #tpu.memory_space<vmem>>, vector<16x256xf32>
    tpu.vector_store %arg4[%c0_4, %c0_5], %6 {strides = array<i32>} : memref<16x256xf32, #tpu.memory_space<vmem>>, vector<16x256xf32>,
    %c0_i32_6 = arith.constant 0 : i32
    %8 = arith.cmpi eq, %arg1, %c0_i32_6 : i32
    %9 = arith.extui %8 : i1 to i32
    %c0_i32_7 = arith.constant 0 : i32
    %10 = arith.cmpi ne, %9, %c0_i32_7 : i32
    scf.if %10 {
      %c0_8 = arith.constant 0 : index
      %c0_9 = arith.constant 0 : index
      %11 = vector.load %arg4[%c0_8, %c0_9] : memref<16x256xf32, #tpu.memory_space<vmem>>, vector<16x256xf32>
      %cst = arith.constant dense<0.000000e+00> : vector<16xf32>
      %12 = vector.multi_reduction <add>, %11, %cst [1] : vector<16x256xf32> to vector<16xf32>
      %13 = vector.shape_cast %12 : vector<16xf32> to vector<16x1xf32>
      %cst_10 = arith.constant dense<0.000000e+00> : vector<1xf32>
      %14 = vector.multi_reduction <add>, %13, %cst_10 [0] : vector<16x1xf32> to vector<1xf32>
      %15 = vector.shape_cast %14 : vector<1xf32> to vector<1x1xf32>
      %cst_11 = arith.constant 2.4414062E-6 : f32
      %16 = vector.broadcast %cst_11 : f32 to vector<1x1xf32>
      %17 = arith.mulf %15, %16 : vector<1x1xf32>
      %18 = vector.shape_cast %17 : vector<1x1xf32> to vector<1x1xf32>
      %19 = vector.broadcast %18 : vector<1x1xf32> to vector<1x128xf32>
      %c0_12 = arith.constant 0 : index
      %c0_13 = arith.constant 0 : index
      %20 = vector.load %arg3[%c0_12, %c0_13] : memref<1x128xf32, #tpu.memory_space<vmem>>, vector<1x128xf32>
      tpu.vector_store %arg3[%c0_12, %c0_13], %19 {strides = array<i32>} : memref<1x128xf32, #tpu.memory_space<vmem>>, vector<1x128xf32>,
    } else {
    }
    return
  }
  func.func @transform_0(%arg0: i32, %arg1: i32) -> (i32, i32) {
    %c1_i32 = arith.constant 1 : i32
    %0 = arith.muli %arg0, %c1_i32 : i32
    %1 = arith.addi %0, %arg1 : i32
    %c0_i32 = arith.constant 0 : i32
    %c0_i32_0 = arith.constant 0 : i32
    return %c0_i32, %1 : i32, i32
  }
  func.func @transform_1(%arg0: i32, %arg1: i32) -> (i32, i32) {
    %c0_i32 = arith.constant 0 : i32
    %c0_i32_0 = arith.constant 0 : i32
    return %c0_i32, %arg0 : i32, i32
  }
}

</mosaic_0001>

<llo_original>
// kernel: tpu_custom_call.1
$region0: #{tpu_custom_call.1}
  #allocation0 [shape = 'u32[]', space=smem, size = 0x4, offset = 0x4, fixed_abs, tag = 'smem constant byte address 0x4 - core index']
  #allocation1 [shape = 'u32[144,128]{1,0:T(1,128)}', space=vmem, size = 0x12000, scoped, tag = 'internal scratch']
  #allocation2 [shape = 'f32[16,256]{1,0:T(8,128)}', space=vmem, size = 0x4000, scoped, tag = 'scratch operand']
  %s0 = inlined_call_operand.hbm [shape: f32[16,256], index: 0, kind: input, shape index: {}]
  %s1 = inlined_call_operand.hbm [shape: f32[1,128], index: 1, kind: output, shape index: {}]
  %s2 = sld [smem:[#allocation0]]
  $region26: #{tpu_custom_call.1} parent=0
    _
  %s4 = ssub.s32 1, %s2
  %s5 = scalar_select 0, %s4, %s2
  $region1: #{tpu_custom_call.1} parent=0
    #allocation3 [shape = 'u8[16384]{0}', space=vmem, size = 0x4000, scoped, tag = 'input window, operand 0, single buffered']
    #allocation4 [shape = 's32[1]{0}', space=sflag, size = 0x4, scoped, tag = 'scoped memory for tpu_custom_call.1']
    #allocation5 [shape = 's32[1]{0}', space=sflag, size = 0x4, scoped, tag = 'scoped memory for tpu_custom_call.1']
    #allocation6 [shape = 'u8[512]{0}', space=vmem, size = 0x400, scoped, tag = 'output window, operand 0, single buffered']
    %6 = vsyncpa [#allocation4], 0
    %7 = vsyncpa [#allocation5], 0
    // Predicated region
    $region2: #{tpu_custom_call.1} parent=1 // pred_check
      _
    $region3: #{tpu_custom_call.1} parent=1 // pred_check_branch
      %9 = sbr.rel (0) target = $region5
    $region4: #{tpu_custom_call.1} parent=1 // pred_region
      %s10 = sadd.s32 0, 0
      %s11 = smul.u32 2, %s10
      %s13 = ssub.s32 512, 512
      %14 = vsyncadd [#allocation4], %s13
      %s15 = smul.addr %s11, 128
      %s16 = scalar_lea.hbm %s0, %s15
      %s17 = sshll.u32 [#allocation3], 4
      %s18 = int_to_ptr.vmem [resolvable:$true] %s17
      %23 = dma.hbm_to_vmem [thread:$0]  %s16, 512, %s18, [#allocation4], 256, 256, 16
    $region5: #{tpu_custom_call.1} parent=1 // pred_fallthru
      _
    // Predicated region
    $region6: #{tpu_custom_call.1} parent=1 // pred_check
      _
    $region7: #{tpu_custom_call.1} parent=1 // pred_check_branch
      %25 = sbr.rel (0) target = $region9
    $region8: #{tpu_custom_call.1} parent=1 // pred_region
      %26 = dma.done [#allocation4], 512
    $region9: #{tpu_custom_call.1} parent=1 // pred_fallthru
      _
    %s27 = sadd.s32 0, 0
    %s28 = smul.u32 2, %s27
    %p29 = scmp.eq.s32.totalorder 0, 0
    // Predicated region
    $region10: #{tpu_custom_call.1} parent=1 // pred_check
      %p30 = pneg %p29
    $region11: #{tpu_custom_call.1} parent=1 // pred_check_branch
      %32 = sbr.rel (%p30) target = $region13
    $region12: #{tpu_custom_call.1} parent=1 // pred_region
      %33 = vst [vmem:[#allocation2] sm:$0xff] 0.0
      %34 = vst [vmem:[#allocation2 + $0x8] sm:$0xff] 0.0
      %35 = vst [vmem:[#allocation2 + $0x10] sm:$0xff] 0.0
      %36 = vst [vmem:[#allocation2 + $0x18] sm:$0xff] 0.0
    $region13: #{tpu_custom_call.1} parent=1 // pred_fallthru
      _
    %v37 = vld [vmem:[#allocation3] sm:$0xff]
    %v38 = vld [vmem:[#allocation3 + $0x8] sm:$0xff]
    %v39 = vld [vmem:[#allocation3 + $0x10] sm:$0xff]
    %v40 = vld [vmem:[#allocation3 + $0x18] sm:$0xff]
    %v41 = vmul.f32 %v37, %v37
    %v42 = vmul.f32 %v38, %v38
    %v43 = vmul.f32 %v39, %v39
    %v44 = vmul.f32 %v40, %v40
    %v45 = vld [vmem:[#allocation2] sm:$0xff]
    %v46 = vld [vmem:[#allocation2 + $0x8] sm:$0xff]
    %v47 = vld [vmem:[#allocation2 + $0x10] sm:$0xff]
    %v48 = vld [vmem:[#allocation2 + $0x18] sm:$0xff]
    %v49 = vadd.f32 %v45, %v41
    %v50 = vadd.f32 %v46, %v42
    %v51 = vadd.f32 %v47, %v43
    %v52 = vadd.f32 %v48, %v44
    %53 = vst [vmem:[#allocation2] sm:$0xff] %v49
    %54 = vst [vmem:[#allocation2 + $0x8] sm:$0xff] %v50
    %55 = vst [vmem:[#allocation2 + $0x10] sm:$0xff] %v51
    %56 = vst [vmem:[#allocation2 + $0x18] sm:$0xff] %v52
    // Predicated region
    $region14: #{tpu_custom_call.1} parent=1 // pred_check
      %p57 = pneg %p29
    $region15: #{tpu_custom_call.1} parent=1 // pred_check_branch
      %59 = sbr.rel (%p57) target = $region17
    $region16: #{tpu_custom_call.1} parent=1 // pred_region
      %v60 = vld [vmem:[#allocation2] sm:$0xff]
      %v61 = vld [vmem:[#allocation2 + $0x8] sm:$0xff]
      %v62 = vld [vmem:[#allocation2 + $0x10] sm:$0xff]
      %v63 = vld [vmem:[#allocation2 + $0x18] sm:$0xff]
      %v64 = vadd.f32 %v60, %v61
      %65 = vadd.xlane.f32.xlu0 %v64
      %v66 = vpop.xlane.xlu0 %65
      %v67 = vadd.f32 %v62, %v63
      %68 = vadd.xlane.f32.xlu0 %v67
      %v69 = vpop.xlane.xlu0 %68
      %v70 = vadd.f32 %v66, %v69
      %v71 = vrot.slane %v70, 4
      %v72 = vadd.f32 %v70, %v71
      %v73 = vrot.slane %v72, 2
      %v74 = vadd.f32 %v72, %v73
      %v75 = vrot.slane %v74, 1
      %v76 = vadd.f32 %v74, %v75
      %v77 = vmul.f32 %v76, 2.4414062e-06
      %78 = vst [vmem:[#allocation6] sm:$0x1] %v77
    $region17: #{tpu_custom_call.1} parent=1 // pred_fallthru
      _
    // Predicated region
    $region18: #{tpu_custom_call.1} parent=1 // pred_check
      _
    $region19: #{tpu_custom_call.1} parent=1 // pred_check_branch
      %80 = sbr.rel (0) target = $region21
    $region20: #{tpu_custom_call.1} parent=1 // pred_region
      %s82 = ssub.s32 16, 16
      %83 = vsyncadd [#allocation5], %s82
      %s85 = sshll.u32 [#allocation6], 4
      %s86 = int_to_ptr.vmem [resolvable:$true] %s85
      %88 = dma.vmem_to_hbm [thread:$0]  %s86, 16, %s1, [#allocation5]
    $region21: #{tpu_custom_call.1} parent=1 // pred_fallthru
      _
    // Predicated region
    $region22: #{tpu_custom_call.1} parent=1 // pred_check
      _
    $region23: #{tpu_custom_call.1} parent=1 // pred_check_branch
      %90 = sbr.rel (0) target = $region25
    $region24: #{tpu_custom_call.1} parent=1 // pred_region
      %91 = dma.done [#allocation5], 16
    $region25: #{tpu_custom_call.1} parent=1 // pred_fallthru
      _
    %92 = vsyncpa [#allocation4], 1
    %93 = vsyncpa [#allocation5], 1

</llo_original>
